<compile_context>
chip_gen: v6e
topology: v6e:2x2x1
jax: 0.10.0
libtpu: 0.0.40
codegen_flags: <defaults>
</compile_context>

<pallas_src>
import functools

import jax
import jax.numpy as jnp
from jax.experimental import pallas as pl
from jax.experimental.pallas import tpu as pltpu


def _round_up(n, m):
    return ((n + m - 1) // m) * m


def _bce_masked_kernel(x_ref, t_ref, len_ref, out_ref, acc_ref, *,
                       pos_weight, batch, max_len):
    i = pl.program_id(0)          # batch-tile index
    j = pl.program_id(1)          # time-tile index
    nb = pl.num_programs(0)
    nt = pl.num_programs(1)

    TB, TT = acc_ref.shape

    @pl.when((i == 0) & (j == 0))
    def _init():
        acc_ref[...] = jnp.zeros_like(acc_ref)
        out_ref[0, 0] = jnp.float32(0.0)

    # Global (row, col) coordinates of every element of this block.
    row = jax.lax.broadcasted_iota(jnp.int32, (TB, TT), 0) + i * TB
    col = jax.lax.broadcasted_iota(jnp.int32, (TB, TT), 1) + j * TT

    in_bounds = (row < batch) & (col < max_len)              # wrapper padding
    seq_mask = col.astype(jnp.float32) < len_ref[...]        # (TB,1) broadcast
    m = jnp.where(in_bounds & seq_mask, 1.0, 0.0)

    x = x_ref[...].astype(jnp.float32) * m
    t = t_ref[...].astype(jnp.float32) * m

    # Numerically stable BCE-with-logits (PyTorch pos_weight formulation):
    #   loss = (1 - t) * x + (1 + (pw - 1) * t) * (log1p(exp(-|x|)) + max(-x, 0))
    log_weight = 1.0 + (pos_weight - 1.0) * t
    softplus_negabs = jnp.log1p(jnp.exp(-jnp.abs(x))) + jnp.maximum(-x, 0.0)
    bce = (1.0 - t) * x + log_weight * softplus_negabs

    # In-bounds masked positions keep their log(2) contribution, exactly like
    # the PyTorch module; only alignment padding is zeroed out.
    acc_ref[...] += jnp.where(in_bounds, bce, 0.0)

    @pl.when((i == nb - 1) & (j == nt - 1))
    def _finalize():
        out_ref[0, 0] = jnp.sum(acc_ref[...])


def bce_loss_masked(x, target, length, pos_weight=1.0):
    """Pallas TPU forward for BCELossMasked.

    x, target: (B, T) float; length: (B,) int or None; pos_weight: python scalar.
    """
    B, T = x.shape
    if length is None:
        length = jnp.full((B,), T, dtype=jnp.int32)

    # --- choose lane/sublane-aligned block sizes and pad inputs -------------
    TT = 512 if T > 512 else _round_up(T, 128)
    T_pad = _round_up(T, TT)
    TB = 64 if B > 64 else _round_up(B, 8)
    B_pad = _round_up(B, TB)

    x_p = jnp.zeros((B_pad, T_pad), jnp.float32).at[:B, :T].set(
        x.astype(jnp.float32))
    t_p = jnp.zeros((B_pad, T_pad), jnp.float32).at[:B, :T].set(
        target.astype(jnp.float32))
    len_p = jnp.zeros((B_pad, 1), jnp.float32).at[:B, 0].set(
        length.astype(jnp.float32))

    grid = (B_pad // TB, T_pad // TT)

    kernel = functools.partial(
        _bce_masked_kernel, pos_weight=float(pos_weight), batch=B, max_len=T)

    total = pl.pallas_call(
        kernel,
        out_shape=jax.ShapeDtypeStruct((1, 1), jnp.float32),
        grid_spec=pltpu.PrefetchScalarGridSpec(
            num_scalar_prefetch=0,
            grid=grid,
            in_specs=[
                pl.BlockSpec((TB, TT), lambda i, j: (i, j)),   # x
                pl.BlockSpec((TB, TT), lambda i, j: (i, j)),   # target
                pl.BlockSpec((TB, 1), lambda i, j: (i, 0)),    # lengths
            ],
            out_specs=pl.BlockSpec(memory_space=pltpu.MemorySpace.SMEM),
            scratch_shapes=[pltpu.VMEM((TB, TT), jnp.float32)],
        ),
        compiler_params=pltpu.CompilerParams(
            dimension_semantics=("arbitrary", "arbitrary")),
        cost_estimate=pl.CostEstimate(
            flops=10 * B_pad * T_pad,
            transcendentals=2 * B_pad * T_pad,
            bytes_accessed=2 * 4 * B_pad * T_pad),
    )(x_p, t_p, len_p)

    # Denominator needs no kernel work: mask.sum() == sum_b min(length_b, T).
    num_items = jnp.sum(jnp.minimum(length.astype(jnp.float32), jnp.float32(T)))
    return total[0, 0] / num_items


def _reference_loss(x, target, length, pos_weight):
    """Pure-JAX reference reproducing the PyTorch module semantics."""
    B, T = x.shape
    mask = (jnp.arange(T)[None, :] < length[:, None]).astype(jnp.float32)
    xm = x.astype(jnp.float32) * mask
    tm = target.astype(jnp.float32) * mask
    log_weight = 1.0 + (pos_weight - 1.0) * tm
    loss = (1.0 - tm) * xm + log_weight * (
        jnp.log1p(jnp.exp(-jnp.abs(xm))) + jnp.maximum(-xm, 0.0))
    return jnp.sum(loss) / jnp.sum(mask)


if __name__ == "__main__":
    key = jax.random.PRNGKey(0)
    B, T = 2, 30
    pos_weight = 5.0

    kx, kt = jax.random.split(key)
    x = jax.random.normal(kx, (B, T), dtype=jnp.float32) * 3.0          # logits
    target = (jax.random.uniform(kt, (B, T)) > 0.7).astype(jnp.float32)  # {0,1}
    length = jnp.array([30, 19], dtype=jnp.int32)

    loss = bce_loss_masked(x, target, length, pos_weight=pos_weight)
    loss = jax.block_until_ready(loss)

    ref = _reference_loss(x, target, length, pos_weight)
    assert jnp.allclose(loss, ref, rtol=1e-5, atol=1e-6), (loss, ref)

    print("KERNEL_OK")
</pallas_src>

<mosaic_0001>
module attributes {stable_mosaic.version = 11 : i64} {
  func.func @_bce_masked_kernel(%arg0: i32, %arg1: i32, %arg2: memref<8x128xf32, #tpu.memory_space<vmem>>, %arg3: memref<8x128xf32, #tpu.memory_space<vmem>>, %arg4: memref<8x1xf32, #tpu.memory_space<vmem>>, %arg5: memref<1x1xf32, #tpu.memory_space<smem>>, %arg6: memref<8x128xf32, #tpu.memory_space<vmem>>) attributes {dimension_semantics = [#tpu.dimension_semantics<arbitrary>, #tpu.dimension_semantics<arbitrary>], iteration_bounds = array<i64: 1, 1>, scalar_prefetch = 0 : i64, scratch_operands = 1 : i64, tpu.core_type = #tpu.core_type<tc>, window_params = [{transform_indices = @transform_0, window_bounds = array<i64: 8, 128>}, {transform_indices = @transform_1, window_bounds = array<i64: 8, 128>}, {transform_indices = @transform_2, window_bounds = array<i64: 8, 1>}, {transform_indices = @transform_3, window_bounds = array<i64: 1, 1>}]} {
    %c0_i32 = arith.constant 0 : i32
    %0 = arith.cmpi eq, %arg0, %c0_i32 : i32
    %c0_i32_0 = arith.constant 0 : i32
    %1 = arith.cmpi eq, %arg1, %c0_i32_0 : i32
    %2 = arith.andi %0, %1 : i1
    %3 = arith.extui %2 : i1 to i32
    %c0_i32_1 = arith.constant 0 : i32
    %4 = arith.cmpi ne, %3, %c0_i32_1 : i32
    scf.if %4 {
      %cst_22 = arith.constant 0.000000e+00 : f32
      %59 = vector.broadcast %cst_22 : f32 to vector<8x128xf32>
      %c0_23 = arith.constant 0 : index
      %c0_24 = arith.constant 0 : index
      %60 = vector.load %arg6[%c0_23, %c0_24] : memref<8x128xf32, #tpu.memory_space<vmem>>, vector<8x128xf32>
      tpu.vector_store %arg6[%c0_23, %c0_24], %59 {strides = array<i32>} : memref<8x128xf32, #tpu.memory_space<vmem>>, vector<8x128xf32>,
      %cst_25 = arith.constant 0.000000e+00 : f32
      %c0_26 = arith.constant 0 : index
      %c0_27 = arith.constant 0 : index
      %61 = memref.load %arg5[%c0_26, %c0_27] : memref<1x1xf32, #tpu.memory_space<smem>>
      memref.store %cst_25, %arg5[%c0_26, %c0_27] : memref<1x1xf32, #tpu.memory_space<smem>>
    } else {
    }
    %5 = tpu.iota {dimensions = array<i32: 0>} : vector<8x128xi32>
    %c8_i32 = arith.constant 8 : i32
    %6 = arith.muli %arg0, %c8_i32 : i32
    %7 = vector.broadcast %6 : i32 to vector<8x128xi32>
    %8 = arith.addi %5, %7 : vector<8x128xi32>
    %9 = tpu.iota {dimensions = array<i32: 1>} : vector<8x128xi32>
    %c128_i32 = arith.constant 128 : i32
    %10 = arith.muli %arg1, %c128_i32 : i32
    %11 = vector.broadcast %10 : i32 to vector<8x128xi32>
    %12 = arith.addi %9, %11 : vector<8x128xi32>
    %c2_i32 = arith.constant 2 : i32
    %13 = vector.broadcast %c2_i32 : i32 to vector<8x128xi32>
    %14 = arith.cmpi slt, %8, %13 : vector<8x128xi32>
    %c30_i32 = arith.constant 30 : i32
    %15 = vector.broadcast %c30_i32 : i32 to vector<8x128xi32>
    %16 = arith.cmpi slt, %12, %15 : vector<8x128xi32>
    %17 = arith.andi %14, %16 : vector<8x128xi1>
    %18 = arith.sitofp %12 : vector<8x128xi32> to vector<8x128xf32>
    %c0 = arith.constant 0 : index
    %c0_2 = arith.constant 0 : index
    %19 = vector.load %arg4[%c0, %c0_2] : memref<8x1xf32, #tpu.memory_space<vmem>>, vector<8x1xf32>
    %20 = vector.broadcast %19 : vector<8x1xf32> to vector<8x128xf32>
    %21 = arith.cmpf olt, %18, %20 : vector<8x128xf32>
    %22 = arith.andi %17, %21 : vector<8x128xi1>
    %cst = arith.constant 1.000000e+00 : f32
    %cst_3 = arith.constant 0.000000e+00 : f32
    %23 = vector.broadcast %cst : f32 to vector<8x128xf32>
    %24 = vector.broadcast %cst_3 : f32 to vector<8x128xf32>
    %25 = arith.select %22, %23, %24 : vector<8x128xi1>, vector<8x128xf32>
    %c0_4 = arith.constant 0 : index
    %c0_5 = arith.constant 0 : index
    %26 = vector.load %arg2[%c0_4, %c0_5] : memref<8x128xf32, #tpu.memory_space<vmem>>, vector<8x128xf32>
    %27 = arith.mulf %26, %25 : vector<8x128xf32>
    %c0_6 = arith.constant 0 : index
    %c0_7 = arith.constant 0 : index
    %28 = vector.load %arg3[%c0_6, %c0_7] : memref<8x128xf32, #tpu.memory_space<vmem>>, vector<8x128xf32>
    %29 = arith.mulf %28, %25 : vector<8x128xf32>
    %cst_8 = arith.constant 4.000000e+00 : f32
    %30 = vector.broadcast %cst_8 : f32 to vector<8x128xf32>
    %31 = arith.mulf %30, %29 : vector<8x128xf32>
    %cst_9 = arith.constant 1.000000e+00 : f32
    %32 = vector.broadcast %cst_9 : f32 to vector<8x128xf32>
    %33 = arith.addf %32, %31 : vector<8x128xf32>
    %34 = math.absf %27 : vector<8x128xf32>
    %cst_10 = arith.constant 0.000000e+00 : f32
    %35 = vector.broadcast %cst_10 : f32 to vector<8x128xf32>
    %36 = arith.subf %35, %34 : vector<8x128xf32>
    %37 = math.exp %36 : vector<8x128xf32>
    %38 = math.log1p %37 : vector<8x128xf32>
    %cst_11 = arith.constant 0.000000e+00 : f32
    %39 = vector.broadcast %cst_11 : f32 to vector<8x128xf32>
    %40 = arith.subf %39, %27 : vector<8x128xf32>
    %cst_12 = arith.constant 0.000000e+00 : f32
    %41 = vector.broadcast %cst_12 : f32 to vector<8x128xf32>
    %42 = arith.maximumf %40, %41 : vector<8x128xf32>
    %43 = arith.addf %38, %42 : vector<8x128xf32>
    %cst_13 = arith.constant 1.000000e+00 : f32
    %44 = vector.broadcast %cst_13 : f32 to vector<8x128xf32>
    %45 = arith.subf %44, %29 : vector<8x128xf32>
    %46 = arith.mulf %45, %27 : vector<8x128xf32>
    %47 = arith.mulf %33, %43 : vector<8x128xf32>
    %48 = arith.addf %46, %47 : vector<8x128xf32>
    %c0_14 = arith.constant 0 : index
    %c0_15 = arith.constant 0 : index
    %49 = vector.load %arg6[%c0_14, %c0_15] : memref<8x128xf32, #tpu.memory_space<vmem>>, vector<8x128xf32>
    %cst_16 = arith.constant 0.000000e+00 : f32
    %50 = vector.broadcast %cst_16 : f32 to vector<8x128xf32>
    %51 = arith.select %17, %48, %50 : vector<8x128xi1>, vector<8x128xf32>
    %52 = arith.addf %49, %51 : vector<8x128xf32>
    %c0_17 = arith.constant 0 : index
    %c0_18 = arith.constant 0 : index
    %53 = vector.load %arg6[%c0_17, %c0_18] : memref<8x128xf32, #tpu.memory_space<vmem>>, vector<8x128xf32>
    tpu.vector_store %arg6[%c0_17, %c0_18], %52 {strides = array<i32>} : memref<8x128xf32, #tpu.memory_space<vmem>>, vector<8x128xf32>,
    %c0_i32_19 = arith.constant 0 : i32
    %54 = arith.cmpi eq, %arg0, %c0_i32_19 : i32
    %c0_i32_20 = arith.constant 0 : i32
    %55 = arith.cmpi eq, %arg1, %c0_i32_20 : i32
    %56 = arith.andi %54, %55 : i1
    %57 = arith.extui %56 : i1 to i32
    %c0_i32_21 = arith.constant 0 : i32
    %58 = arith.cmpi ne, %57, %c0_i32_21 : i32
    scf.if %58 {
      %c0_22 = arith.constant 0 : index
      %c0_23 = arith.constant 0 : index
      %59 = vector.load %arg6[%c0_22, %c0_23] : memref<8x128xf32, #tpu.memory_space<vmem>>, vector<8x128xf32>
      %60 = vector.shape_cast %59 : vector<8x128xf32> to vector<1x8x128xf32>
      %cst_24 = arith.constant dense<0.000000e+00> : vector<1xf32>
      %61 = vector.multi_reduction <add>, %60, %cst_24 [1, 2] : vector<1x8x128xf32> to vector<1xf32>
      %62 = vector.shape_cast %61 : vector<1xf32> to vector<1x1x1xf32>
      %63 = vector.extract %62[0, 0, 0] : f32 from vector<1x1x1xf32>
      %c0_25 = arith.constant 0 : index
      %c0_26 = arith.constant 0 : index
      %64 = memref.load %arg5[%c0_25, %c0_26] : memref<1x1xf32, #tpu.memory_space<smem>>
      memref.store %63, %arg5[%c0_25, %c0_26] : memref<1x1xf32, #tpu.memory_space<smem>>
    } else {
    }
    return
  }
  func.func @transform_0(%arg0: i32, %arg1: i32) -> (i32, i32) {
    %c0_i32 = arith.constant 0 : i32
    return %arg0, %arg1 : i32, i32
  }
  func.func @transform_1(%arg0: i32, %arg1: i32) -> (i32, i32) {
    %c0_i32 = arith.constant 0 : i32
    return %arg0, %arg1 : i32, i32
  }
  func.func @transform_2(%arg0: i32, %arg1: i32) -> (i32, i32) {
    %c0_i32 = arith.constant 0 : i32
    %c0_i32_0 = arith.constant 0 : i32
    return %arg0, %c0_i32 : i32, i32
  }
  func.func @transform_3(%arg0: i32, %arg1: i32) -> (i32, i32) {
    %c0_i32 = arith.constant 0 : i32
    %c0_i32_0 = arith.constant 0 : i32
    %c0_i32_1 = arith.constant 0 : i32
    return %c0_i32, %c0_i32_0 : i32, i32
  }
}

</mosaic_0001>

<llo_original>
// kernel: tpu_custom_call.1
$region0: #{tpu_custom_call.1}
  #allocation0 [shape = 'u32[]', space=smem, size = 0x4, offset = 0x4, fixed_abs, tag = 'smem constant byte address 0x4 - core index']
  #allocation1 [shape = 'u32[144,128]{1,0:T(1,128)}', space=vmem, size = 0x12000, scoped, tag = 'internal scratch']
  #allocation2 [shape = 'f32[8,128]{1,0:T(8,128)}', space=vmem, size = 0x1000, scoped, tag = 'scratch operand']
  %s0 = inlined_call_operand.vmem [shape: f32[8,128], index: 0, kind: input, shape index: {}]
  %s1 = inlined_call_operand.hbm [shape: f32[8,128], index: 1, kind: input, shape index: {}]
  %s2 = inlined_call_operand.vmem [shape: f32[8,1], index: 2, kind: input, shape index: {}]
  %s3 = inlined_call_operand.hbm [shape: f32[1,1], index: 3, kind: output, shape index: {}]
  %s4 = sld [smem:[#allocation0]]
  $region34: #{tpu_custom_call.1} parent=0
    _
  %s6 = ssub.s32 1, %s4
  %s7 = scalar_select 0, %s6, %s4
  $region1: #{tpu_custom_call.1} parent=0
    #allocation3 [shape = 'u8[4096]{0}', space=vmem, size = 0x1000, scoped, tag = 'input window, operand 1, single buffered']
    #allocation4 [shape = 's32[1]{0}', space=sflag, size = 0x4, scoped, tag = 'scoped memory for tpu_custom_call.1']
    #allocation5 [shape = 's32[1]{0}', space=sflag, size = 0x4, scoped, tag = 'scoped memory for tpu_custom_call.1']
    #allocation6 [shape = 'u8[512]{0}', space=smem, size = 0x200, scoped, tag = 'output window, operand 0, single buffered']
    %8 = vsyncpa [#allocation4], 0
    %9 = vsyncpa [#allocation5], 0
    // Predicated region
    $region2: #{tpu_custom_call.1} parent=1 // pred_check
      _
    $region3: #{tpu_custom_call.1} parent=1 // pred_check_branch
      %11 = sbr.rel (0) target = $region5
    $region4: #{tpu_custom_call.1} parent=1 // pred_region
      _
    $region5: #{tpu_custom_call.1} parent=1 // pred_fallthru
      _
    // Predicated region
    $region6: #{tpu_custom_call.1} parent=1 // pred_check
      _
    $region7: #{tpu_custom_call.1} parent=1 // pred_check_branch
      %13 = sbr.rel (0) target = $region9
    $region8: #{tpu_custom_call.1} parent=1 // pred_region
      %s15 = ssub.s32 128, 128
      %16 = vsyncadd [#allocation4], %s15
      %s18 = sshll.u32 [#allocation3], 4
      %s19 = int_to_ptr.vmem [resolvable:$true] %s18
      %21 = dma.hbm_to_vmem [thread:$0]  %s1, 128, %s19, [#allocation4]
    $region9: #{tpu_custom_call.1} parent=1 // pred_fallthru
      _
    // Predicated region
    $region10: #{tpu_custom_call.1} parent=1 // pred_check
      _
    $region11: #{tpu_custom_call.1} parent=1 // pred_check_branch
      %23 = sbr.rel (0) target = $region13
    $region12: #{tpu_custom_call.1} parent=1 // pred_region
      _
    $region13: #{tpu_custom_call.1} parent=1 // pred_fallthru
      _
    // Predicated region
    $region14: #{tpu_custom_call.1} parent=1 // pred_check
      _
    $region15: #{tpu_custom_call.1} parent=1 // pred_check_branch
      %25 = sbr.rel (0) target = $region17
    $region16: #{tpu_custom_call.1} parent=1 // pred_region
      %26 = dma.done [#allocation4], 128
    $region17: #{tpu_custom_call.1} parent=1 // pred_fallthru
      _
    %p27 = scmp.eq.s32.totalorder 0, 0
    %p28 = scmp.eq.s32.totalorder 0, 0
    %p29 = pnand %p27, %p28
    %p30 = pneg %p29
    // Predicated region
    $region18: #{tpu_custom_call.1} parent=1 // pred_check
      _
    $region19: #{tpu_custom_call.1} parent=1 // pred_check_branch
      %32 = sbr.rel (%p29) target = $region21
    $region20: #{tpu_custom_call.1} parent=1 // pred_region
      %33 = vst [vmem:[#allocation2] sm:$0xff] 0.0
      %s34 = scalar_lea.smem [#allocation6], 0
      %35 = sst [smem:[%s34]] 0.0
    $region21: #{tpu_custom_call.1} parent=1 // pred_fallthru
      _
    %v36 = vlaneseq
    %v37 = vshrl.u32 %v36, 7
    %s38 = smul.u32 0, 8
    %v39 = vstv %s38
    %v40 = vadd.s32 %v37, %v39
    %v41 = vlaneseq
    %v42 = vand.u32 %v41, 127
    %s43 = smul.u32 0, 128
    %v44 = vstv %s43
    %v45 = vadd.s32 %v42, %v44
    %vm46 = vcmp.lt.s32.totalorder %v40, 2
    %vm47 = vcmp.lt.s32.totalorder %v45, 30
    %vm48 = vmand %vm46, %vm47
    %v49 = vcvt.s32.f32 %v45
    %v50 = vld [vmem:[%s2] sm:$0xff]
    %52 = vset.pattern.permute.xlu0 0
    %53 = vperm.xlu0 %52, %v50
    %v54 = vpop.permute.xlu0 %53
    %vm56 = vcmp.lt.f32.partialorder %v49, %v54
    %vm57 = vmand %vm48, %vm56
    %v58 = vsel %vm57, 1.0, 0.0
    %v59 = vld [vmem:[%s0] sm:$0xff]
    %v60 = vmul.f32 %v59, %v58
    %v61 = vld [vmem:[#allocation3] sm:$0xff]
    %v62 = vmul.f32 %v61, %v58
    %v63 = vmul.f32 %v62, 4.0
    %v64 = vadd.f32 %v63, 1.0
    %v65 = vand.u32 2147483647, %v60
    %v66 = vsub.f32 0.0, %v65
    %v67 = vmul.f32 %v66, 1.442695
    %v68 = vpow.pop %v67
    %v69 = vadd.f32 %v68, 1.0
    %v70 = vlog2.pop %v69
    %v71 = vmul.f32 %v70, 0.6931472
    %v72 = vmul.f32 -0.5, %v68
    %v73 = vadd.f32 %v72, 1.0
    %v74 = vmul.f32 %v73, %v68
    %v75 = vand.u32 2147483647, %v68
    %vm76 = vcmp.lt.f32.partialorder %v75, 0.0004427343
    %v77 = vsel %vm76, %v74, %v71
    %v78 = vsub.f32 0.0, %v60
    %v79 = vmax.f32 %v78, 0.0
    %v80 = vadd.f32 %v77, %v79
    %v81 = vsub.f32 1.0, %v62
    %v82 = vmul.f32 %v81, %v60
    %v83 = vmul.f32 %v64, %v80
    %v84 = vadd.f32 %v82, %v83
    %v85 = vld [vmem:[#allocation2] sm:$0xff]
    %v86 = vsel %vm48, %v84, 0.0
    %v87 = vadd.f32 %v85, %v86
    %88 = vst [vmem:[#allocation2] sm:$0xff] %v87
    // Predicated region
    $region22: #{tpu_custom_call.1} parent=1 // pred_check
      _
    $region23: #{tpu_custom_call.1} parent=1 // pred_check_branch
      %90 = sbr.rel (%p29) target = $region25
    $region24: #{tpu_custom_call.1} parent=1 // pred_region
      %v91 = vld [vmem:[#allocation2] sm:$0xff]
      %92 = vadd.xlane.f32.xlu0 %v91
      %v93 = vpop.xlane.xlu0 %92
      %v94 = vrot.slane %v93, 4
      %v95 = vadd.f32 %v93, %v94
      %v96 = vrot.slane %v95, 2
      %v97 = vadd.f32 %v95, %v96
      %v98 = vrot.slane %v97, 1
      %v99 = vadd.f32 %v97, %v98
      %s100 = vtos %v99
      %s101 = scalar_lea.smem [#allocation6], 0
      %102 = sst [smem:[%s101]] %s100
    $region25: #{tpu_custom_call.1} parent=1 // pred_fallthru
      _
    // Predicated region
    $region26: #{tpu_custom_call.1} parent=1 // pred_check
      _
    $region27: #{tpu_custom_call.1} parent=1 // pred_check_branch
      %104 = sbr.rel (0) target = $region29
    $region28: #{tpu_custom_call.1} parent=1 // pred_region
      %s106 = ssub.s32 16, 16
      %107 = vsyncadd [#allocation5], %s106
      %110 = dma.smem_to_hbm [#allocation6], 16, %s3, [#allocation5]
    $region29: #{tpu_custom_call.1} parent=1 // pred_fallthru
      _
    // Predicated region
    $region30: #{tpu_custom_call.1} parent=1 // pred_check
      _
    $region31: #{tpu_custom_call.1} parent=1 // pred_check_branch
      %112 = sbr.rel (0) target = $region33
    $region32: #{tpu_custom_call.1} parent=1 // pred_region
      %113 = dma.done [#allocation5], 16
    $region33: #{tpu_custom_call.1} parent=1 // pred_fallthru
      _
    %114 = sfence
    %115 = vsyncpa [#allocation4], 1
    %116 = vsyncpa [#allocation5], 1

</llo_original>
